<compile_context>
chip_gen: v6e
topology: v6e:2x2x1
jax: 0.10.0
libtpu: 0.0.40
codegen_flags: <defaults>
</compile_context>

<pallas_src>
import jax
import jax.numpy as jnp
from jax.experimental import pallas as pl
from jax.experimental.pallas import tpu as pltpu

LANE = 128
SUBLANE = 8


def _round_up(n, m):
    return ((n + m - 1) // m) * m


def _cdiv(a, b):
    return (a + b - 1) // b


# ---------------------------------------------------------------------------
# Kernel: o = x + (gelu(x @ W1 + b1) @ W2_eff + b2_eff)   (alpha folded in)
# ---------------------------------------------------------------------------
def _residual_mlp_kernel(x_ref, w1_ref, b1_ref, w2_ref, b2_ref, o_ref):
    x = x_ref[...]                                                       # (tm, Dp)
    h = jnp.dot(x, w1_ref[...], preferred_element_type=jnp.float32) + b1_ref[...]
    # nn.GELU() default = exact erf form.
    h = 0.5 * h * (1.0 + jax.lax.erf(h * 0.7071067811865476))
    o_ref[...] = x + jnp.dot(h, w2_ref[...], preferred_element_type=jnp.float32) + b2_ref[...]


# ---------------------------------------------------------------------------
# One-time parameter packing (block-diagonal fold + alpha folding)
# ---------------------------------------------------------------------------
def pack_params(w1, b1, w2, b2, alpha):
    """w1/w2 stored (in, out), b1/b2 shape (D,).  Returns (fold, w1p, b1p, w2p, b2p).

    If D divides the 128-lane width, 4 (=128/D) logical rows are folded into
    one 128-lane row and the weights become block-diagonal; otherwise we fall
    back to zero-padding the feature dim to a lane multiple (fold=1).
    alpha is folded into fc2 so the kernel needs no extra multiply.
    """
    D = int(w1.shape[0])
    if D < LANE and LANE % D == 0:
        fold = LANE // D
    else:
        fold = 1
    Dp = _round_up(D * fold, LANE)

    w1p = jnp.zeros((Dp, Dp), jnp.float32)
    w2p = jnp.zeros((Dp, Dp), jnp.float32)
    w2_eff = (alpha * w2).astype(jnp.float32)
    for g in range(fold):
        s = g * D
        w1p = w1p.at[s:s + D, s:s + D].set(w1.astype(jnp.float32))
        w2p = w2p.at[s:s + D, s:s + D].set(w2_eff)

    b1p = jnp.zeros((1, Dp), jnp.float32).at[0, :fold * D].set(
        jnp.tile(b1.astype(jnp.float32), fold))
    b2p = jnp.zeros((1, Dp), jnp.float32).at[0, :fold * D].set(
        jnp.tile((alpha * b2).astype(jnp.float32), fold))
    return fold, w1p, b1p, w2p, b2p


# ---------------------------------------------------------------------------
# Wrapper
# ---------------------------------------------------------------------------
def residual_mlp_pallas(x2d, w1p, b1p, w2p, b2p, fold, *, max_tile_m=2048):
    """x2d: (M, D) f32.  Packed weights from pack_params.  Returns (M, D)."""
    M, D = x2d.shape
    Dp = w1p.shape[0]

    # Fold rows into lanes: (M, D) -> (Mf, fold*D), then row-tile along M.
    Mf = _cdiv(M, fold)
    Mp = _round_up(Mf, SUBLANE)
    tm = min(Mp, max_tile_m)
    # Ensure >=2 grid steps on large inputs so v7x's two TensorCores both work.
    if Mp == tm and Mp >= 4096:
        tm = _round_up(_cdiv(Mp, 2), SUBLANE)
    Mp = _round_up(Mp, tm)
    n_m = Mp // tm

    xp = jnp.zeros((Mp * fold, D), jnp.float32).at[:M].set(x2d)
    xf = xp.reshape(Mp, fold * D)
    if fold * D < Dp:
        xf = jnp.zeros((Mp, Dp), jnp.float32).at[:, :fold * D].set(xf)

    vmem = pltpu.MemorySpace.VMEM
    out = pl.pallas_call(
        _residual_mlp_kernel,
        out_shape=jax.ShapeDtypeStruct((Mp, Dp), jnp.float32),
        grid=(n_m,),
        in_specs=[
            pl.BlockSpec((tm, Dp), lambda i: (i, 0), memory_space=vmem),
            pl.BlockSpec((Dp, Dp), lambda i: (0, 0), memory_space=vmem),
            pl.BlockSpec((1, Dp), lambda i: (0, 0), memory_space=vmem),
            pl.BlockSpec((Dp, Dp), lambda i: (0, 0), memory_space=vmem),
            pl.BlockSpec((1, Dp), lambda i: (0, 0), memory_space=vmem),
        ],
        out_specs=pl.BlockSpec((tm, Dp), lambda i: (i, 0), memory_space=vmem),
        compiler_params=pltpu.CompilerParams(
            dimension_semantics=("parallel",),
        ),
    )(xf, w1p, b1p, w2p, b2p)

    # Unfold back to (rows, D) and drop padded rows.
    out = out[:, :fold * D].reshape(Mp * fold, D)
    return out[:M]


# ---------------------------------------------------------------------------
# Module
# ---------------------------------------------------------------------------
class ResidualMLPPallas:
    """Pallas equivalent of the PyTorch ResidualMLP (fc1 -> GELU -> fc2, residual)."""

    def __init__(self, embed_dim, alpha=0.1, seed=0):
        self.embed_dim = embed_dim
        self.alpha = float(alpha)

        key = jax.random.PRNGKey(seed)
        k_w1, k_b1 = jax.random.split(key, 2)
        bound = 1.0 / jnp.sqrt(float(embed_dim))  # PyTorch nn.Linear default init.
        # Stored as (in, out) so the kernel computes x @ W directly.
        w1 = jax.random.uniform(k_w1, (embed_dim, embed_dim), jnp.float32,
                                minval=-bound, maxval=bound)
        b1 = jax.random.uniform(k_b1, (embed_dim,), jnp.float32,
                                minval=-bound, maxval=bound)
        # fc2 is zero-initialized in the PyTorch module (weight and bias).
        w2 = jnp.zeros((embed_dim, embed_dim), jnp.float32)
        b2 = jnp.zeros((embed_dim,), jnp.float32)
        self.load_weights(w1, b1, w2, b2)

    def load_weights(self, w1, b1, w2, b2):
        """Set raw (in, out)-layout weights and rebuild the packed kernel params."""
        self.w_fc1 = jnp.asarray(w1, jnp.float32)
        self.b_fc1 = jnp.asarray(b1, jnp.float32)
        self.w_fc2 = jnp.asarray(w2, jnp.float32)
        self.b_fc2 = jnp.asarray(b2, jnp.float32)
        (self.fold, self.w1p, self.b1p, self.w2p, self.b2p) = pack_params(
            self.w_fc1, self.b_fc1, self.w_fc2, self.b_fc2, self.alpha)

    def __call__(self, x):
        """x: (B, T, embed_dim) float32 -> (B, T, embed_dim)."""
        B, T, D = x.shape
        assert D == self.embed_dim
        x2d = x.reshape(B * T, D).astype(jnp.float32)
        out2d = residual_mlp_pallas(
            x2d, self.w1p, self.b1p, self.w2p, self.b2p, self.fold)
        return out2d.reshape(B, T, D)


# ---------------------------------------------------------------------------
# Main
# ---------------------------------------------------------------------------
if __name__ == "__main__":
    D = 32
    alpha = 0.1

    def ref_forward(x3d, w1, b1, w2, b2):
        Bb, Tt, Dd = x3d.shape
        x2d = x3d.reshape(Bb * Tt, Dd)
        h = x2d @ w1 + b1
        h = 0.5 * h * (1.0 + jax.lax.erf(h / jnp.sqrt(2.0)))
        mlp = h @ w2 + b2
        return (x2d + alpha * mlp).reshape(Bb, Tt, Dd)

    key = jax.random.PRNGKey(0)
    kx1, kx2, kw2, kb2 = jax.random.split(key, 4)

    # --- Test 1: module at PyTorch init (fc2 zeroed -> identity mapping) ---
    B, T = 2, 8
    x = jax.random.normal(kx1, (B, T, D), jnp.float32)
    model = ResidualMLPPallas(embed_dim=D, alpha=alpha, seed=0)
    out = model(x)
    jax.block_until_ready(out)

    expected = ref_forward(x, model.w_fc1, model.b_fc1, model.w_fc2, model.b_fc2)
    assert out.shape == (B, T, D)
    assert jnp.allclose(out, expected, atol=1e-5, rtol=1e-5)
    assert jnp.allclose(out, x, atol=1e-5)  # zero fc2 -> identity at init.

    # --- Test 2: non-zero fc2 and a row count not divisible by the fold ---
    B2, T2 = 2, 9  # M = 18, exercises fold/row padding + slice-off.
    x2 = jax.random.normal(kx2, (B2, T2, D), jnp.float32)
    w2 = jax.random.normal(kw2, (D, D), jnp.float32) * 0.05
    b2 = jax.random.normal(kb2, (D,), jnp.float32) * 0.05
    model.load_weights(model.w_fc1, model.b_fc1, w2, b2)
    out2 = model(x2)
    jax.block_until_ready(out2)

    expected2 = ref_forward(x2, model.w_fc1, model.b_fc1, w2, b2)
    assert out2.shape == (B2, T2, D)
    assert jnp.allclose(out2, expected2, atol=1e-5, rtol=1e-5)

    print("KERNEL_OK")
</pallas_src>

<mosaic_0001>
module attributes {stable_mosaic.version = 11 : i64} {
  func.func @_residual_mlp_kernel(%arg0: i32, %arg1: memref<8x128xf32, #tpu.memory_space<vmem>>, %arg2: memref<128x128xf32, #tpu.memory_space<vmem>>, %arg3: memref<1x128xf32, #tpu.memory_space<vmem>>, %arg4: memref<128x128xf32, #tpu.memory_space<vmem>>, %arg5: memref<1x128xf32, #tpu.memory_space<vmem>>, %arg6: memref<8x128xf32, #tpu.memory_space<vmem>>) attributes {dimension_semantics = [#tpu.dimension_semantics<parallel>], iteration_bounds = array<i64: 1>, scalar_prefetch = 0 : i64, scratch_operands = 0 : i64, tpu.core_type = #tpu.core_type<tc>, window_params = [{transform_indices = @transform_0, window_bounds = array<i64: 8, 128>}, {pipeline_mode = #tpu.pipeline_mode<synchronous>, transform_indices = @transform_1, window_bounds = array<i64: 128, 128>}, {pipeline_mode = #tpu.pipeline_mode<synchronous>, transform_indices = @transform_2, window_bounds = array<i64: 1, 128>}, {pipeline_mode = #tpu.pipeline_mode<synchronous>, transform_indices = @transform_3, window_bounds = array<i64: 128, 128>}, {pipeline_mode = #tpu.pipeline_mode<synchronous>, transform_indices = @transform_4, window_bounds = array<i64: 1, 128>}, {transform_indices = @transform_5, window_bounds = array<i64: 8, 128>}]} {
    %c0 = arith.constant 0 : index
    %c0_0 = arith.constant 0 : index
    %0 = vector.load %arg1[%c0, %c0_0] : memref<8x128xf32, #tpu.memory_space<vmem>>, vector<8x128xf32>
    %c0_1 = arith.constant 0 : index
    %c0_2 = arith.constant 0 : index
    %1 = vector.load %arg2[%c0_1, %c0_2] : memref<128x128xf32, #tpu.memory_space<vmem>>, vector<128x128xf32>
    %cst = arith.constant dense<0.000000e+00> : vector<8x128xf32>
    %2 = tpu.matmul %0, %1, %cst {dimension_numbers = #tpu.dot_dimension_numbers<[1], [0], [0], [1], [0, 0, 1, 1], [], []>} : vector<8x128xf32>, vector<128x128xf32>, vector<8x128xf32> -> vector<8x128xf32>
    %c0_3 = arith.constant 0 : index
    %c0_4 = arith.constant 0 : index
    %3 = vector.load %arg3[%c0_3, %c0_4] : memref<1x128xf32, #tpu.memory_space<vmem>>, vector<1x128xf32>
    %4 = vector.broadcast %3 : vector<1x128xf32> to vector<8x128xf32>
    %5 = arith.addf %2, %4 : vector<8x128xf32>
    %cst_5 = arith.constant 5.000000e-01 : f32
    %6 = vector.broadcast %cst_5 : f32 to vector<8x128xf32>
    %7 = arith.mulf %6, %5 : vector<8x128xf32>
    %cst_6 = arith.constant 0.707106769 : f32
    %8 = vector.broadcast %cst_6 : f32 to vector<8x128xf32>
    %9 = arith.mulf %5, %8 : vector<8x128xf32>
    %10 = math.erf %9 : vector<8x128xf32>
    %cst_7 = arith.constant 1.000000e+00 : f32
    %11 = vector.broadcast %cst_7 : f32 to vector<8x128xf32>
    %12 = arith.addf %11, %10 : vector<8x128xf32>
    %13 = arith.mulf %7, %12 : vector<8x128xf32>
    %c0_8 = arith.constant 0 : index
    %c0_9 = arith.constant 0 : index
    %14 = vector.load %arg4[%c0_8, %c0_9] : memref<128x128xf32, #tpu.memory_space<vmem>>, vector<128x128xf32>
    %cst_10 = arith.constant dense<0.000000e+00> : vector<8x128xf32>
    %15 = tpu.matmul %13, %14, %cst_10 {dimension_numbers = #tpu.dot_dimension_numbers<[1], [0], [0], [1], [0, 0, 1, 1], [], []>} : vector<8x128xf32>, vector<128x128xf32>, vector<8x128xf32> -> vector<8x128xf32>
    %16 = arith.addf %0, %15 : vector<8x128xf32>
    %c0_11 = arith.constant 0 : index
    %c0_12 = arith.constant 0 : index
    %17 = vector.load %arg5[%c0_11, %c0_12] : memref<1x128xf32, #tpu.memory_space<vmem>>, vector<1x128xf32>
    %18 = vector.broadcast %17 : vector<1x128xf32> to vector<8x128xf32>
    %19 = arith.addf %16, %18 : vector<8x128xf32>
    %c0_13 = arith.constant 0 : index
    %c0_14 = arith.constant 0 : index
    %20 = vector.load %arg6[%c0_13, %c0_14] : memref<8x128xf32, #tpu.memory_space<vmem>>, vector<8x128xf32>
    tpu.vector_store %arg6[%c0_13, %c0_14], %19 {strides = array<i32>} : memref<8x128xf32, #tpu.memory_space<vmem>>, vector<8x128xf32>,
    return
  }
  func.func @transform_0(%arg0: i32) -> (i32, i32) {
    %c0_i32 = arith.constant 0 : i32
    %c0_i32_0 = arith.constant 0 : i32
    return %arg0, %c0_i32 : i32, i32
  }
  func.func @transform_1(%arg0: i32) -> (i32, i32) {
    %c0_i32 = arith.constant 0 : i32
    %c0_i32_0 = arith.constant 0 : i32
    %c0_i32_1 = arith.constant 0 : i32
    return %c0_i32, %c0_i32_0 : i32, i32
  }
  func.func @transform_2(%arg0: i32) -> (i32, i32) {
    %c0_i32 = arith.constant 0 : i32
    %c0_i32_0 = arith.constant 0 : i32
    %c0_i32_1 = arith.constant 0 : i32
    return %c0_i32, %c0_i32_0 : i32, i32
  }
  func.func @transform_3(%arg0: i32) -> (i32, i32) {
    %c0_i32 = arith.constant 0 : i32
    %c0_i32_0 = arith.constant 0 : i32
    %c0_i32_1 = arith.constant 0 : i32
    return %c0_i32, %c0_i32_0 : i32, i32
  }
  func.func @transform_4(%arg0: i32) -> (i32, i32) {
    %c0_i32 = arith.constant 0 : i32
    %c0_i32_0 = arith.constant 0 : i32
    %c0_i32_1 = arith.constant 0 : i32
    return %c0_i32, %c0_i32_0 : i32, i32
  }
  func.func @transform_5(%arg0: i32) -> (i32, i32) {
    %c0_i32 = arith.constant 0 : i32
    %c0_i32_0 = arith.constant 0 : i32
    return %arg0, %c0_i32 : i32, i32
  }
}

</mosaic_0001>

<llo_original>
// kernel: tpu_custom_call.1
$region0: #{tpu_custom_call.1}
  #allocation0 [shape = 'u32[]', space=smem, size = 0x4, offset = 0x4, fixed_abs, tag = 'smem constant byte address 0x4 - core index']
  #allocation1 [shape = 'u32[144,128]{1,0:T(1,128)}', space=vmem, size = 0x12000, scoped, tag = 'internal scratch']
  %s0 = inlined_call_operand.hbm [shape: f32[8,128], index: 0, kind: input, shape index: {}]
  %s1 = inlined_call_operand.hbm [shape: f32[128,128], index: 1, kind: input, shape index: {}]
  %s2 = inlined_call_operand.vmem [shape: f32[1,128], index: 2, kind: input, shape index: {}]
  %s3 = inlined_call_operand.hbm [shape: f32[128,128], index: 3, kind: input, shape index: {}]
  %s4 = inlined_call_operand.vmem [shape: f32[1,128], index: 4, kind: input, shape index: {}]
  %s5 = inlined_call_operand.hbm [shape: f32[8,128], index: 5, kind: output, shape index: {}]
  %s6 = sld [smem:[#allocation0]]
  $region42: #{tpu_custom_call.1} parent=0
    _
  %s8 = ssub.s32 1, %s6
  %s9 = scalar_select 0, %s8, %s6
  $region1: #{tpu_custom_call.1} parent=0
    #allocation2 [shape = 'u8[4096]{0}', space=vmem, size = 0x1000, scoped, tag = 'input window, operand 0, single buffered']
    #allocation3 [shape = 's32[1]{0}', space=sflag, size = 0x4, scoped, tag = 'scoped memory for tpu_custom_call.1']
    #allocation4 [shape = 's32[1]{0}', space=sflag, size = 0x4, scoped, tag = 'scoped memory for tpu_custom_call.1']
    #allocation5 [shape = 'u8[65536]{0}', space=vmem, size = 0x10000, scoped, tag = 'input window, operand 1, single buffered']
    #allocation6 [shape = 's32[1]{0}', space=sflag, size = 0x4, scoped, tag = 'scoped memory for tpu_custom_call.1']
    #allocation7 [shape = 'u8[65536]{0}', space=vmem, size = 0x10000, scoped, tag = 'input window, operand 3, single buffered']
    #allocation8 [shape = 'u8[4096]{0}', space=vmem, size = 0x1000, scoped, tag = 'output window, operand 0, single buffered']
    %10 = vsyncpa [#allocation3], 0
    %11 = vsyncpa [#allocation6], 0
    %12 = vsyncpa [#allocation4], 0
    // Predicated region
    $region2: #{tpu_custom_call.1} parent=1 // pred_check
      _
    $region3: #{tpu_custom_call.1} parent=1 // pred_check_branch
      %14 = sbr.rel (0) target = $region5
    $region4: #{tpu_custom_call.1} parent=1 // pred_region
      %s16 = ssub.s32 128, 128
      %17 = vsyncadd [#allocation3], %s16
      %s19 = sshll.u32 [#allocation2], 4
      %s20 = int_to_ptr.vmem [resolvable:$true] %s19
      %22 = dma.hbm_to_vmem [thread:$0]  %s0, 128, %s20, [#allocation3]
    $region5: #{tpu_custom_call.1} parent=1 // pred_fallthru
      _
    // Predicated region
    $region6: #{tpu_custom_call.1} parent=1 // pred_check
      _
    $region7: #{tpu_custom_call.1} parent=1 // pred_check_branch
      %24 = sbr.rel (0) target = $region9
    $region8: #{tpu_custom_call.1} parent=1 // pred_region
      %s26 = ssub.s32 2048, 2048
      %27 = vsyncadd [#allocation6], %s26
      %s28 = sshll.u32 [#allocation5], 4
      %s29 = int_to_ptr.vmem [resolvable:$true] %s28
      %34 = dma.hbm_to_vmem [thread:$0]  %s1, 2048, %s29, [#allocation6], 128, 128, 8
    $region9: #{tpu_custom_call.1} parent=1 // pred_fallthru
      _
    // Predicated region
    $region10: #{tpu_custom_call.1} parent=1 // pred_check
      _
    $region11: #{tpu_custom_call.1} parent=1 // pred_check_branch
      %36 = sbr.rel (0) target = $region13
    $region12: #{tpu_custom_call.1} parent=1 // pred_region
      _
    $region13: #{tpu_custom_call.1} parent=1 // pred_fallthru
      _
    // Predicated region
    $region14: #{tpu_custom_call.1} parent=1 // pred_check
      _
    $region15: #{tpu_custom_call.1} parent=1 // pred_check_branch
      %38 = sbr.rel (0) target = $region17
    $region16: #{tpu_custom_call.1} parent=1 // pred_region
      %s40 = ssub.s32 2048, 2048
      %41 = vsyncadd [#allocation6], %s40
      %s42 = sshll.u32 [#allocation7], 4
      %s43 = int_to_ptr.vmem [resolvable:$true] %s42
      %48 = dma.hbm_to_vmem [thread:$0]  %s3, 2048, %s43, [#allocation6], 128, 128, 8
    $region17: #{tpu_custom_call.1} parent=1 // pred_fallthru
      _
    // Predicated region
    $region18: #{tpu_custom_call.1} parent=1 // pred_check
      _
    $region19: #{tpu_custom_call.1} parent=1 // pred_check_branch
      %50 = sbr.rel (0) target = $region21
    $region20: #{tpu_custom_call.1} parent=1 // pred_region
      _
    $region21: #{tpu_custom_call.1} parent=1 // pred_fallthru
      _
    // Predicated region
    $region22: #{tpu_custom_call.1} parent=1 // pred_check
      _
    $region23: #{tpu_custom_call.1} parent=1 // pred_check_branch
      %52 = sbr.rel (0) target = $region25
    $region24: #{tpu_custom_call.1} parent=1 // pred_region
      %53 = dma.done [#allocation3], 128
    $region25: #{tpu_custom_call.1} parent=1 // pred_fallthru
      _
    // Predicated region
    $region26: #{tpu_custom_call.1} parent=1 // pred_check
      _
    $region27: #{tpu_custom_call.1} parent=1 // pred_check_branch
      %55 = sbr.rel (0) target = $region29
    $region28: #{tpu_custom_call.1} parent=1 // pred_region
      %56 = dma.done [#allocation6], 2048
    $region29: #{tpu_custom_call.1} parent=1 // pred_fallthru
      _
    // Predicated region
    $region30: #{tpu_custom_call.1} parent=1 // pred_check
      _
    $region31: #{tpu_custom_call.1} parent=1 // pred_check_branch
      %58 = sbr.rel (0) target = $region33
    $region32: #{tpu_custom_call.1} parent=1 // pred_region
      %59 = dma.done [#allocation6], 2048
    $region33: #{tpu_custom_call.1} parent=1 // pred_fallthru
      _
    %v60 = vld [vmem:[#allocation2] sm:$0xff]
    %v61 = vld [vmem:[#allocation5] sm:$0xff]
    %v62 = vld [vmem:[#allocation5 + $0x8] sm:$0xff]
    %v63 = vld [vmem:[#allocation5 + $0x10] sm:$0xff]
    %v64 = vld [vmem:[#allocation5 + $0x18] sm:$0xff]
    %v65 = vld [vmem:[#allocation5 + $0x20] sm:$0xff]
    %v66 = vld [vmem:[#allocation5 + $0x28] sm:$0xff]
    %v67 = vld [vmem:[#allocation5 + $0x30] sm:$0xff]
    %v68 = vld [vmem:[#allocation5 + $0x38] sm:$0xff]
    %v69 = vld [vmem:[#allocation5 + $0x40] sm:$0xff]
    %v70 = vld [vmem:[#allocation5 + $0x48] sm:$0xff]
    %v71 = vld [vmem:[#allocation5 + $0x50] sm:$0xff]
    %v72 = vld [vmem:[#allocation5 + $0x58] sm:$0xff]
    %v73 = vld [vmem:[#allocation5 + $0x60] sm:$0xff]
    %v74 = vld [vmem:[#allocation5 + $0x68] sm:$0xff]
    %v75 = vld [vmem:[#allocation5 + $0x70] sm:$0xff]
    %v76 = vld [vmem:[#allocation5 + $0x78] sm:$0xff]
    %v77 = vld [vmem:[%s2] sm:$0x1]
    %v79 = vlaneseq
    %v80 = vshrl.u32 %v79, 7
    %v81 = vsub.s32 0, %v80
    %v82 = vrot.slane %v77, %v81
    %84 = vmatprep.subr.mxu0 0.0
    %85 = vmatpush1.msra.mxu0 %v76
    %86 = vmatprep.subr.mxu0 0.0
    %87 = vmatpush1.msra.mxu0 %v75
    %88 = vmatprep.subr.mxu0 0.0
    %89 = vmatpush1.msra.mxu0 %v74
    %90 = vmatprep.subr.mxu0 0.0
    %91 = vmatpush1.msra.mxu0 %v73
    %92 = vmatprep.subr.mxu0 0.0
    %93 = vmatpush1.msra.mxu0 %v72
    %94 = vmatprep.subr.mxu0 0.0
    %95 = vmatpush1.msra.mxu0 %v71
    %96 = vmatprep.subr.mxu0 0.0
    %97 = vmatpush1.msra.mxu0 %v70
    %98 = vmatprep.subr.mxu0 0.0
    %99 = vmatpush1.msra.mxu0 %v69
    %100 = vmatprep.subr.mxu0 0.0
    %101 = vmatpush1.msra.mxu0 %v68
    %102 = vmatprep.subr.mxu0 0.0
    %103 = vmatpush1.msra.mxu0 %v67
    %104 = vmatprep.subr.mxu0 0.0
    %105 = vmatpush1.msra.mxu0 %v66
    %106 = vmatprep.subr.mxu0 0.0
    %107 = vmatpush1.msra.mxu0 %v65
    %108 = vmatprep.subr.mxu0 0.0
    %109 = vmatpush1.msra.mxu0 %v64
    %110 = vmatprep.subr.mxu0 0.0
    %111 = vmatpush1.msra.mxu0 %v63
    %112 = vmatprep.subr.mxu0 0.0
    %113 = vmatpush1.msra.mxu0 %v62
    %114 = vmatprep.subr.mxu0 0.0
    %115 = vmatpush1.msra.mxu0 %v61
    %116 = vmatprep.subr.mxu0 0.0
    %117 = vmatpush2.msra.mxu0 0.0
    %118 = vmatprep.subr.mxu0 0.0
    %119 = vmatpush2.msra.mxu0 0.0
    %120 = vmatprep.subr.mxu0 0.0
    %121 = vmatpush2.msra.mxu0 0.0
    %122 = vmatprep.subr.mxu0 0.0
    %123 = vmatpush2.msra.mxu0 0.0
    %124 = vmatprep.subr.mxu0 0.0
    %125 = vmatpush2.msra.mxu0 0.0
    %126 = vmatprep.subr.mxu0 0.0
    %127 = vmatpush2.msra.mxu0 0.0
    %128 = vmatprep.subr.mxu0 0.0
    %129 = vmatpush2.msra.mxu0 0.0
    %130 = vmatprep.subr.mxu0 0.0
    %131 = vmatpush2.msra.mxu0 0.0
    %132 = vmatprep.subr.mxu0 0.0
    %133 = vmatpush2.msra.mxu0 0.0
    %134 = vmatprep.subr.mxu0 0.0
    %135 = vmatpush2.msra.mxu0 0.0
    %136 = vmatprep.subr.mxu0 0.0
    %137 = vmatpush2.msra.mxu0 0.0
    %138 = vmatprep.subr.mxu0 0.0
    %139 = vmatpush2.msra.mxu0 0.0
    %140 = vmatprep.subr.mxu0 0.0
    %141 = vmatpush2.msra.mxu0 0.0
    %142 = vmatprep.subr.mxu0 0.0
    %143 = vmatpush2.msra.mxu0 0.0
    %144 = vmatprep.subr.mxu0 0.0
    %145 = vmatpush2.msra.mxu0 0.0
    %146 = vmatprep.subr.mxu0 0.0
    %147 = vmatpush2.msra.mxu0 0.0
    %148 = vmatprep.mubr.f32.mxu0 0.0
    %149 = vmatmul.mubr.f32.gmra.mxu0 %v60
    %v150 = vpop.f32.mrf.mxu0
    %v151 = vadd.f32 %v82, %v150
    %v152 = vpop.f32.mrf.mxu0
    %153 = vdwg.mxu0
    %v154 = vmul.f32 %v151, 0.5
    %v155 = vmul.f32 %v151, 0.70710677
    %v156 = verf.f32.pop %v155
    %v157 = vadd.f32 %v156, 1.0
    %v158 = vmul.f32 %v154, %v157
    %v159 = vld [vmem:[#allocation7] sm:$0xff]
    %v160 = vld [vmem:[#allocation7 + $0x8] sm:$0xff]
    %v161 = vld [vmem:[#allocation7 + $0x10] sm:$0xff]
    %v162 = vld [vmem:[#allocation7 + $0x18] sm:$0xff]
    %v163 = vld [vmem:[#allocation7 + $0x20] sm:$0xff]
    %v164 = vld [vmem:[#allocation7 + $0x28] sm:$0xff]
    %v165 = vld [vmem:[#allocation7 + $0x30] sm:$0xff]
    %v166 = vld [vmem:[#allocation7 + $0x38] sm:$0xff]
    %v167 = vld [vmem:[#allocation7 + $0x40] sm:$0xff]
    %v168 = vld [vmem:[#allocation7 + $0x48] sm:$0xff]
    %v169 = vld [vmem:[#allocation7 + $0x50] sm:$0xff]
    %v170 = vld [vmem:[#allocation7 + $0x58] sm:$0xff]
    %v171 = vld [vmem:[#allocation7 + $0x60] sm:$0xff]
    %v172 = vld [vmem:[#allocation7 + $0x68] sm:$0xff]
    %v173 = vld [vmem:[#allocation7 + $0x70] sm:$0xff]
    %v174 = vld [vmem:[#allocation7 + $0x78] sm:$0xff]
    %175 = vmatprep.subr.mxu0 0.0
    %176 = vmatpush1.msra.mxu0 %v174
    %177 = vmatprep.subr.mxu0 0.0
    %178 = vmatpush1.msra.mxu0 %v173
    %179 = vmatprep.subr.mxu0 0.0
    %180 = vmatpush1.msra.mxu0 %v172
    %181 = vmatprep.subr.mxu0 0.0
    %182 = vmatpush1.msra.mxu0 %v171
    %183 = vmatprep.subr.mxu0 0.0
    %184 = vmatpush1.msra.mxu0 %v170
    %185 = vmatprep.subr.mxu0 0.0
    %186 = vmatpush1.msra.mxu0 %v169
    %187 = vmatprep.subr.mxu0 0.0
    %188 = vmatpush1.msra.mxu0 %v168
    %189 = vmatprep.subr.mxu0 0.0
    %190 = vmatpush1.msra.mxu0 %v167
    %191 = vmatprep.subr.mxu0 0.0
    %192 = vmatpush1.msra.mxu0 %v166
    %193 = vmatprep.subr.mxu0 0.0
    %194 = vmatpush1.msra.mxu0 %v165
    %195 = vmatprep.subr.mxu0 0.0
    %196 = vmatpush1.msra.mxu0 %v164
    %197 = vmatprep.subr.mxu0 0.0
    %198 = vmatpush1.msra.mxu0 %v163
    %199 = vmatprep.subr.mxu0 0.0
    %200 = vmatpush1.msra.mxu0 %v162
    %201 = vmatprep.subr.mxu0 0.0
    %202 = vmatpush1.msra.mxu0 %v161
    %203 = vmatprep.subr.mxu0 0.0
    %204 = vmatpush1.msra.mxu0 %v160
    %205 = vmatprep.subr.mxu0 0.0
    %206 = vmatpush1.msra.mxu0 %v159
    %207 = vmatprep.subr.mxu0 0.0
    %208 = vmatpush2.msra.mxu0 0.0
    %209 = vmatprep.subr.mxu0 0.0
    %210 = vmatpush2.msra.mxu0 0.0
    %211 = vmatprep.subr.mxu0 0.0
    %212 = vmatpush2.msra.mxu0 0.0
    %213 = vmatprep.subr.mxu0 0.0
    %214 = vmatpush2.msra.mxu0 0.0
    %215 = vmatprep.subr.mxu0 0.0
    %216 = vmatpush2.msra.mxu0 0.0
    %217 = vmatprep.subr.mxu0 0.0
    %218 = vmatpush2.msra.mxu0 0.0
    %219 = vmatprep.subr.mxu0 0.0
    %220 = vmatpush2.msra.mxu0 0.0
    %221 = vmatprep.subr.mxu0 0.0
    %222 = vmatpush2.msra.mxu0 0.0
    %223 = vmatprep.subr.mxu0 0.0
    %224 = vmatpush2.msra.mxu0 0.0
    %225 = vmatprep.subr.mxu0 0.0
    %226 = vmatpush2.msra.mxu0 0.0
    %227 = vmatprep.subr.mxu0 0.0
    %228 = vmatpush2.msra.mxu0 0.0
    %229 = vmatprep.subr.mxu0 0.0
    %230 = vmatpush2.msra.mxu0 0.0
    %231 = vmatprep.subr.mxu0 0.0
    %232 = vmatpush2.msra.mxu0 0.0
    %233 = vmatprep.subr.mxu0 0.0
    %234 = vmatpush2.msra.mxu0 0.0
    %235 = vmatprep.subr.mxu0 0.0
    %236 = vmatpush2.msra.mxu0 0.0
    %237 = vmatprep.subr.mxu0 0.0
    %238 = vmatpush2.msra.mxu0 0.0
    %239 = vmatprep.mubr.f32.mxu0 0.0
    %240 = vmatmul.mubr.f32.gmra.mxu0 %v158
    %v241 = vpop.f32.mrf.mxu0
    %v242 = vadd.f32 0.0, %v241
    %v243 = vpop.f32.mrf.mxu0
    %244 = vdwg.mxu0
    %v245 = vadd.f32 %v60, %v242
    %v246 = vld [vmem:[%s4] sm:$0x1]
    %v248 = vlaneseq
    %v249 = vshrl.u32 %v248, 7
    %v250 = vsub.s32 0, %v249
    %v251 = vrot.slane %v246, %v250
    %v253 = vadd.f32 %v245, %v251
    %254 = vst [vmem:[#allocation8] sm:$0xff] %v253
    // Predicated region
    $region34: #{tpu_custom_call.1} parent=1 // pred_check
      _
    $region35: #{tpu_custom_call.1} parent=1 // pred_check_branch
      %256 = sbr.rel (0) target = $region37
    $region36: #{tpu_custom_call.1} parent=1 // pred_region
      %s258 = ssub.s32 128, 128
      %259 = vsyncadd [#allocation4], %s258
      %s261 = sshll.u32 [#allocation8], 4
      %s262 = int_to_ptr.vmem [resolvable:$true] %s261
      %264 = dma.vmem_to_hbm [thread:$0]  %s262, 128, %s5, [#allocation4]
    $region37: #{tpu_custom_call.1} parent=1 // pred_fallthru
      _
    // Predicated region
    $region38: #{tpu_custom_call.1} parent=1 // pred_check
      _
    $region39: #{tpu_custom_call.1} parent=1 // pred_check_branch
      %266 = sbr.rel (0) target = $region41
    $region40: #{tpu_custom_call.1} parent=1 // pred_region
      %267 = dma.done [#allocation4], 128
    $region41: #{tpu_custom_call.1} parent=1 // pred_fallthru
      _
    %268 = vsyncpa [#allocation3], 1
    %269 = vsyncpa [#allocation6], 1
    %270 = vsyncpa [#allocation4], 1

</llo_original>
